<compile_context>
chip_gen: v7x
topology: tpu7x:2x2x1
jax: 0.10.0
libtpu: 0.0.40
codegen_flags: <defaults>
</compile_context>

<pallas_src>
import functools

import jax
import jax.numpy as jnp
from jax import lax
from jax.experimental import pallas as pl
from jax.experimental.pallas import tpu as pltpu

# Full-f32 matmul accuracy everywhere (hoisted XLA matmuls, reference, kernel)
# so the split concat-matmul matches the original single matmul bit-closely.
jax.config.update("jax_default_matmul_precision", "highest")


def _round_up(x, m):
    return (x + m - 1) // m * m


def _rec_kernel(xproj_ref, h0_ref, wh_ref, hid_ref, hlast_ref, *, b_blk, batch):
    """Sequential recurrence over the batch axis.

    xproj_ref : (b_blk, w, Hp)  hoisted  x @ Wx + b_in  (lane-padded with zeros)
    h0_ref    : (w, Hp)         initial state (lane-padded)
    wh_ref    : (Hp, Hp)        recurrent weight (zero-padded)
    hid_ref   : (b_blk, w, Hp)  per-step hidden output (consumed by output head)
    hlast_ref : (w, Hp)         VMEM-resident recurrent state / final hidden
    """
    i = pl.program_id(0)

    # Initialize the resident state from pre_state on the first grid step.
    @pl.when(i == 0)
    def _():
        hlast_ref[...] = h0_ref[...]

    full_block = (batch % b_blk) == 0  # static (Python) — no masking needed

    def body(s, h_prev):
        pre = xproj_ref[s] + jnp.dot(
            h_prev, wh_ref[...], preferred_element_type=jnp.float32)
        hidden = jnp.tanh(pre)
        hid_ref[s] = hidden                      # lane-dense (w, Hp) store
        if full_block:
            return hidden
        # Partial last block: don't let padded steps advance the state.
        valid = (i * b_blk + s) < batch
        return jnp.where(valid, hidden, h_prev)

    # Unrolled in-kernel loop over the b_blk recurrence steps of this block;
    # the state is carried in vregs and stored to the resident output once.
    hlast_ref[...] = lax.fori_loop(0, b_blk, body, hlast_ref[...], unroll=True)


def compute_rec(x, pre_state, w_in, b_in, w_out, b_out, *, b_blk=16):
    """x: (batch, w, f) f32; pre_state: (w, hidden) f32 or None.
    w_in: (hidden, f + hidden), b_in: (hidden,)  -- nn.Linear layout
    w_out: (n_class, hidden),   b_out: (n_class,)
    Returns (out (batch, w, n_class), last_hidden (w, hidden))."""
    batch, w, f = x.shape
    hidden = w_in.shape[0]
    n_class = w_out.shape[0]

    if pre_state is None:
        pre_state = jnp.zeros((w, hidden), jnp.float32)

    # cat(x, h) @ W_in^T + b_in  ==  x @ Wx + h @ Wh + b_in
    wx = w_in[:, :f].T                                   # (f, hidden)
    wh = w_in[:, f:].T                                   # (hidden, hidden)

    # --- Hoisted, batch-parallel input projection (no loop-carried dep):
    # one (batch*w, f) @ (f, hidden) matmul instead of `batch` tiny ones on
    # the serial critical path.  Bias folded in here.
    xproj = (x.reshape(batch * w, f) @ wx + b_in).reshape(batch, w, hidden)

    # --- Lane-dense padding of the hidden axis up to a multiple of 128 lanes.
    hp = _round_up(hidden, 128)
    b_blk = max(1, min(b_blk, batch))
    nblk = pl.cdiv(batch, b_blk)
    bpad = nblk * b_blk

    xproj_p = jnp.zeros((bpad, w, hp), jnp.float32).at[:batch, :, :hidden].set(xproj)
    h0_p = jnp.zeros((w, hp), jnp.float32).at[:, :hidden].set(pre_state)
    wh_p = jnp.zeros((hp, hp), jnp.float32).at[:hidden, :hidden].set(wh)

    kernel = functools.partial(_rec_kernel, b_blk=b_blk, batch=batch)

    grid_spec = pltpu.PrefetchScalarGridSpec(
        num_scalar_prefetch=0,
        grid=(nblk,),
        in_specs=[
            pl.BlockSpec((b_blk, w, hp), lambda i: (i, 0, 0)),   # xproj block
            pl.BlockSpec((w, hp), lambda i: (0, 0)),             # h0
            pl.BlockSpec((hp, hp), lambda i: (0, 0)),            # Wh
        ],
        out_specs=[
            pl.BlockSpec((b_blk, w, hp), lambda i: (i, 0, 0)),   # hiddens
            pl.BlockSpec((w, hp), lambda i: (0, 0)),             # h_last (resident)
        ],
    )

    hid_p, hlast_p = pl.pallas_call(
        kernel,
        out_shape=(
            jax.ShapeDtypeStruct((bpad, w, hp), jnp.float32),
            jax.ShapeDtypeStruct((w, hp), jnp.float32),
        ),
        grid_spec=grid_spec,
        compiler_params=pltpu.CompilerParams(
            # Loop-carried state through the resident output block -> the batch
            # axis MUST stay sequential.
            dimension_semantics=("arbitrary",),
        ),
    )(xproj_p, h0_p, wh_p)

    hiddens = hid_p[:batch, :, :hidden]
    h_last = hlast_p[:, :hidden]

    # --- Hoisted, batch-parallel output head: one batched matmul + softmax
    # (softmax(dim=1) of each (w, n_class) slab == softmax over classes).
    logits = hiddens.reshape(batch * w, hidden) @ w_out.T + b_out
    out = jax.nn.softmax(logits, axis=-1).reshape(batch, w, n_class)
    return out, h_last


def compute_rec_ref(x, pre_state, w_in, b_in, w_out, b_out):
    """Pure-JAX reference mirroring the PyTorch loop."""
    batch = x.shape[0]
    h = pre_state
    outs = []
    for b in range(batch):
        tmp = jnp.concatenate([x[b], h], axis=1)
        h = jnp.tanh(tmp @ w_in.T + b_in)
        outs.append(jax.nn.softmax(h @ w_out.T + b_out, axis=1))
    return jnp.stack(outs, axis=0), h


if __name__ == "__main__":
    batch, w, in_feature, hidden_size, n_class = 2, 8, 16, 32, 8

    key = jax.random.PRNGKey(0)
    k1, k2, k3, k4, k5, _ = jax.random.split(key, 6)

    # Deterministic synthetic parameters (nn.Linear shapes).
    w_in = jax.random.uniform(k1, (hidden_size, in_feature + hidden_size),
                              jnp.float32, -0.1, 0.1)
    b_in = jax.random.uniform(k2, (hidden_size,), jnp.float32, -0.1, 0.1)
    w_out = jax.random.uniform(k3, (n_class, hidden_size),
                               jnp.float32, -0.1, 0.1)
    b_out = jax.random.uniform(k4, (n_class,), jnp.float32, -0.1, 0.1)

    x = jax.random.normal(k5, (batch, w, in_feature), jnp.float32)
    # pre_state=None in the module -> zeros(w, hidden)
    pre_state = jnp.zeros((w, hidden_size), jnp.float32)

    out, h_last = compute_rec(x, pre_state, w_in, b_in, w_out, b_out)
    jax.block_until_ready((out, h_last))

    out_ref, h_ref = compute_rec_ref(x, pre_state, w_in, b_in, w_out, b_out)
    assert jnp.allclose(out, out_ref, atol=1e-5, rtol=1e-5)
    assert jnp.allclose(h_last, h_ref, atol=1e-5, rtol=1e-5)

    print("KERNEL_OK")
</pallas_src>

<mosaic_0001>
module attributes {stable_mosaic.version = 11 : i64} {
  func.func @_rec_kernel(%arg0: i32, %arg1: memref<2x8x128xf32, #tpu.memory_space<vmem>>, %arg2: memref<8x128xf32, #tpu.memory_space<vmem>>, %arg3: memref<128x128xf32, #tpu.memory_space<vmem>>, %arg4: memref<2x8x128xf32, #tpu.memory_space<vmem>>, %arg5: memref<8x128xf32, #tpu.memory_space<vmem>>) attributes {dimension_semantics = [#tpu.dimension_semantics<arbitrary>], iteration_bounds = array<i64: 1>, scalar_prefetch = 0 : i64, scratch_operands = 0 : i64, tpu.core_type = #tpu.core_type<tc>, window_params = [{transform_indices = @transform_0, window_bounds = array<i64: 2, 8, 128>}, {pipeline_mode = #tpu.pipeline_mode<synchronous>, transform_indices = @transform_1, window_bounds = array<i64: 8, 128>}, {pipeline_mode = #tpu.pipeline_mode<synchronous>, transform_indices = @transform_2, window_bounds = array<i64: 128, 128>}, {transform_indices = @transform_3, window_bounds = array<i64: 2, 8, 128>}, {pipeline_mode = #tpu.pipeline_mode<synchronous>, transform_indices = @transform_4, window_bounds = array<i64: 8, 128>}]} {
    %c0_i32 = arith.constant 0 : i32
    %0 = arith.cmpi eq, %arg0, %c0_i32 : i32
    %1 = arith.extui %0 : i1 to i32
    %c0_i32_0 = arith.constant 0 : i32
    %2 = arith.cmpi ne, %1, %c0_i32_0 : i32
    scf.if %2 {
      %c0_18 = arith.constant 0 : index
      %c0_19 = arith.constant 0 : index
      %27 = vector.load %arg2[%c0_18, %c0_19] : memref<8x128xf32, #tpu.memory_space<vmem>>, vector<8x128xf32>
      %c0_20 = arith.constant 0 : index
      %c0_21 = arith.constant 0 : index
      %28 = vector.load %arg5[%c0_20, %c0_21] : memref<8x128xf32, #tpu.memory_space<vmem>>, vector<8x128xf32>
      tpu.vector_store %arg5[%c0_20, %c0_21], %27 {strides = array<i32>} : memref<8x128xf32, #tpu.memory_space<vmem>>, vector<8x128xf32>,
    } else {
    }
    %c0 = arith.constant 0 : index
    %c0_1 = arith.constant 0 : index
    %3 = vector.load %arg5[%c0, %c0_1] : memref<8x128xf32, #tpu.memory_space<vmem>>, vector<8x128xf32>
    %c0_i32_2 = arith.constant 0 : i32
    %4 = arith.index_cast %c0_i32_2 : i32 to index
    %c0_3 = arith.constant 0 : index
    %c0_4 = arith.constant 0 : index
    %5 = vector.load %arg1[%4, %c0_3, %c0_4] : memref<2x8x128xf32, #tpu.memory_space<vmem>>, vector<1x8x128xf32>
    %6 = vector.shape_cast %5 : vector<1x8x128xf32> to vector<8x128xf32>
    %c0_5 = arith.constant 0 : index
    %c0_6 = arith.constant 0 : index
    %7 = vector.load %arg3[%c0_5, %c0_6] : memref<128x128xf32, #tpu.memory_space<vmem>>, vector<128x128xf32>
    %cst = arith.constant dense<0.000000e+00> : vector<8x128xf32>
    %8 = tpu.matmul %3, %7, %cst {dimension_numbers = #tpu.dot_dimension_numbers<[1], [0], [0], [1], [0, 0, 1, 1], [], []>, precision = #tpu.contract_precision<fp32>} : vector<8x128xf32>, vector<128x128xf32>, vector<8x128xf32> -> vector<8x128xf32>
    %9 = arith.addf %6, %8 : vector<8x128xf32>
    %10 = math.tanh %9 : vector<8x128xf32>
    %11 = arith.index_cast %c0_i32_2 : i32 to index
    %c0_7 = arith.constant 0 : index
    %c0_8 = arith.constant 0 : index
    %12 = vector.load %arg4[%11, %c0_7, %c0_8] : memref<2x8x128xf32, #tpu.memory_space<vmem>>, vector<1x8x128xf32>
    %13 = vector.shape_cast %12 : vector<1x8x128xf32> to vector<8x128xf32>
    %14 = vector.shape_cast %10 : vector<8x128xf32> to vector<1x8x128xf32>
    tpu.vector_store %arg4[%11, %c0_7, %c0_8], %14 {strides = array<i32>} : memref<2x8x128xf32, #tpu.memory_space<vmem>>, vector<1x8x128xf32>,
    %c1_i32 = arith.constant 1 : i32
    %15 = arith.index_cast %c1_i32 : i32 to index
    %c0_9 = arith.constant 0 : index
    %c0_10 = arith.constant 0 : index
    %16 = vector.load %arg1[%15, %c0_9, %c0_10] : memref<2x8x128xf32, #tpu.memory_space<vmem>>, vector<1x8x128xf32>
    %17 = vector.shape_cast %16 : vector<1x8x128xf32> to vector<8x128xf32>
    %c0_11 = arith.constant 0 : index
    %c0_12 = arith.constant 0 : index
    %18 = vector.load %arg3[%c0_11, %c0_12] : memref<128x128xf32, #tpu.memory_space<vmem>>, vector<128x128xf32>
    %cst_13 = arith.constant dense<0.000000e+00> : vector<8x128xf32>
    %19 = tpu.matmul %10, %18, %cst_13 {dimension_numbers = #tpu.dot_dimension_numbers<[1], [0], [0], [1], [0, 0, 1, 1], [], []>, precision = #tpu.contract_precision<fp32>} : vector<8x128xf32>, vector<128x128xf32>, vector<8x128xf32> -> vector<8x128xf32>
    %20 = arith.addf %17, %19 : vector<8x128xf32>
    %21 = math.tanh %20 : vector<8x128xf32>
    %22 = arith.index_cast %c1_i32 : i32 to index
    %c0_14 = arith.constant 0 : index
    %c0_15 = arith.constant 0 : index
    %23 = vector.load %arg4[%22, %c0_14, %c0_15] : memref<2x8x128xf32, #tpu.memory_space<vmem>>, vector<1x8x128xf32>
    %24 = vector.shape_cast %23 : vector<1x8x128xf32> to vector<8x128xf32>
    %25 = vector.shape_cast %21 : vector<8x128xf32> to vector<1x8x128xf32>
    tpu.vector_store %arg4[%22, %c0_14, %c0_15], %25 {strides = array<i32>} : memref<2x8x128xf32, #tpu.memory_space<vmem>>, vector<1x8x128xf32>,
    %c2_i32 = arith.constant 2 : i32
    %c0_16 = arith.constant 0 : index
    %c0_17 = arith.constant 0 : index
    %26 = vector.load %arg5[%c0_16, %c0_17] : memref<8x128xf32, #tpu.memory_space<vmem>>, vector<8x128xf32>
    tpu.vector_store %arg5[%c0_16, %c0_17], %21 {strides = array<i32>} : memref<8x128xf32, #tpu.memory_space<vmem>>, vector<8x128xf32>,
    return
  }
  func.func @transform_0(%arg0: i32) -> (i32, i32, i32) {
    %c0_i32 = arith.constant 0 : i32
    %c0_i32_0 = arith.constant 0 : i32
    %c0_i32_1 = arith.constant 0 : i32
    return %arg0, %c0_i32, %c0_i32_0 : i32, i32, i32
  }
  func.func @transform_1(%arg0: i32) -> (i32, i32) {
    %c0_i32 = arith.constant 0 : i32
    %c0_i32_0 = arith.constant 0 : i32
    %c0_i32_1 = arith.constant 0 : i32
    return %c0_i32, %c0_i32_0 : i32, i32
  }
  func.func @transform_2(%arg0: i32) -> (i32, i32) {
    %c0_i32 = arith.constant 0 : i32
    %c0_i32_0 = arith.constant 0 : i32
    %c0_i32_1 = arith.constant 0 : i32
    return %c0_i32, %c0_i32_0 : i32, i32
  }
  func.func @transform_3(%arg0: i32) -> (i32, i32, i32) {
    %c0_i32 = arith.constant 0 : i32
    %c0_i32_0 = arith.constant 0 : i32
    %c0_i32_1 = arith.constant 0 : i32
    return %arg0, %c0_i32, %c0_i32_0 : i32, i32, i32
  }
  func.func @transform_4(%arg0: i32) -> (i32, i32) {
    %c0_i32 = arith.constant 0 : i32
    %c0_i32_0 = arith.constant 0 : i32
    %c0_i32_1 = arith.constant 0 : i32
    return %c0_i32, %c0_i32_0 : i32, i32
  }
}

</mosaic_0001>

<llo_original>
// kernel: tpu_custom_call.1
$region0: #{tpu_custom_call.1}
  #allocation0 [shape = 'u32[]', space=smem, size = 0x4, offset = 0x4, fixed_abs, tag = 'smem constant byte address 0x4 - core index']
  #allocation1 [shape = 'u32[144,128]{1,0:T(1,128)}', space=vmem, size = 0x12000, scoped, tag = 'internal scratch']
  %s0 = inlined_call_operand.hbm [shape: f32[2,8,128], index: 0, kind: input, shape index: {}]
  %s1 = inlined_call_operand.hbm [shape: f32[8,128], index: 1, kind: input, shape index: {}]
  %s2 = inlined_call_operand.hbm [shape: f32[128,128], index: 2, kind: input, shape index: {}]
  %s3 = inlined_call_operand.hbm [shape: f32[2,8,128], index: 3, kind: output, shape index: {0}]
  %s4 = inlined_call_operand.hbm [shape: f32[8,128], index: 4, kind: output, shape index: {1}]
  %5 = xla_tuple %s3, %s4
  %s6 = sld [smem:[#allocation0]]
  $region46: #{tpu_custom_call.1} parent=0
    _
  %s8 = ssub.s32 1, %s6
  %s9 = scalar_select 0, %s8, %s6
  $region1: #{tpu_custom_call.1} parent=0
    #allocation2 [shape = 'u8[8192]{0}', space=vmem, size = 0x2000, scoped, tag = 'input window, operand 0, single buffered']
    #allocation3 [shape = 's32[1]{0}', space=sflag, size = 0x4, scoped, tag = 'scoped memory for tpu_custom_call.1']
    #allocation4 [shape = 's32[1]{0}', space=sflag, size = 0x4, scoped, tag = 'scoped memory for tpu_custom_call.1']
    #allocation5 [shape = 'u8[4096]{0}', space=vmem, size = 0x1000, scoped, tag = 'input window, operand 1, single buffered']
    #allocation6 [shape = 's32[1]{0}', space=sflag, size = 0x4, scoped, tag = 'scoped memory for tpu_custom_call.1']
    #allocation7 [shape = 'u8[65536]{0}', space=vmem, size = 0x10000, scoped, tag = 'input window, operand 2, single buffered']
    #allocation8 [shape = 'u8[8192]{0}', space=vmem, size = 0x2000, scoped, tag = 'output window, operand 0, single buffered']
    #allocation9 [shape = 'u8[4096]{0}', space=vmem, size = 0x1000, scoped, tag = 'output window, operand 1, single buffered']
    #allocation10 [shape = 's32[1]{0}', space=sflag, size = 0x4, scoped, tag = 'scoped memory for tpu_custom_call.1']
    %10 = vsyncpa [#allocation3], 0
    %11 = vsyncpa [#allocation6], 0
    %12 = vsyncpa [#allocation4], 0
    %13 = vsyncpa [#allocation10], 0
    // Predicated region
    $region2: #{tpu_custom_call.1} parent=1 // pred_check
      _
    $region3: #{tpu_custom_call.1} parent=1 // pred_check_branch
      %15 = sbr.rel (0) target = $region5
    $region4: #{tpu_custom_call.1} parent=1 // pred_region
      %s17 = ssub.s32 256, 256
      %18 = vsyncadd [#allocation3], %s17
      %s19 = sshll.u32 [#allocation2], 4
      %s20 = int_to_ptr.vmem [resolvable:$true] %s19
      %25 = dma.hbm_to_vmem [thread:$0]  %s0, 256, %s20, [#allocation3], 128, 128, 8
    $region5: #{tpu_custom_call.1} parent=1 // pred_fallthru
      _
    // Predicated region
    $region6: #{tpu_custom_call.1} parent=1 // pred_check
      _
    $region7: #{tpu_custom_call.1} parent=1 // pred_check_branch
      %27 = sbr.rel (0) target = $region9
    $region8: #{tpu_custom_call.1} parent=1 // pred_region
      %s29 = ssub.s32 128, 128
      %30 = vsyncadd [#allocation6], %s29
      %s32 = sshll.u32 [#allocation5], 4
      %s33 = int_to_ptr.vmem [resolvable:$true] %s32
      %35 = dma.hbm_to_vmem [thread:$0]  %s1, 128, %s33, [#allocation6]
    $region9: #{tpu_custom_call.1} parent=1 // pred_fallthru
      _
    // Predicated region
    $region10: #{tpu_custom_call.1} parent=1 // pred_check
      _
    $region11: #{tpu_custom_call.1} parent=1 // pred_check_branch
      %37 = sbr.rel (0) target = $region13
    $region12: #{tpu_custom_call.1} parent=1 // pred_region
      %s39 = ssub.s32 2048, 2048
      %40 = vsyncadd [#allocation6], %s39
      %s41 = sshll.u32 [#allocation7], 4
      %s42 = int_to_ptr.vmem [resolvable:$true] %s41
      %47 = dma.hbm_to_vmem [thread:$0]  %s2, 2048, %s42, [#allocation6], 128, 128, 8
    $region13: #{tpu_custom_call.1} parent=1 // pred_fallthru
      _
    // Predicated region
    $region14: #{tpu_custom_call.1} parent=1 // pred_check
      _
    $region15: #{tpu_custom_call.1} parent=1 // pred_check_branch
      %49 = sbr.rel (0) target = $region17
    $region16: #{tpu_custom_call.1} parent=1 // pred_region
      %50 = dma.done [#allocation3], 256
    $region17: #{tpu_custom_call.1} parent=1 // pred_fallthru
      _
    // Predicated region
    $region18: #{tpu_custom_call.1} parent=1 // pred_check
      _
    $region19: #{tpu_custom_call.1} parent=1 // pred_check_branch
      %52 = sbr.rel (0) target = $region21
    $region20: #{tpu_custom_call.1} parent=1 // pred_region
      %53 = dma.done [#allocation6], 128
    $region21: #{tpu_custom_call.1} parent=1 // pred_fallthru
      _
    // Predicated region
    $region22: #{tpu_custom_call.1} parent=1 // pred_check
      _
    $region23: #{tpu_custom_call.1} parent=1 // pred_check_branch
      %55 = sbr.rel (0) target = $region25
    $region24: #{tpu_custom_call.1} parent=1 // pred_region
      %56 = dma.done [#allocation6], 2048
    $region25: #{tpu_custom_call.1} parent=1 // pred_fallthru
      _
    %p57 = scmp.eq.s32.totalorder 0, 0
    // Predicated region
    $region26: #{tpu_custom_call.1} parent=1 // pred_check
      %p58 = pneg %p57
    $region27: #{tpu_custom_call.1} parent=1 // pred_check_branch
      %60 = sbr.rel (%p58) target = $region29
    $region28: #{tpu_custom_call.1} parent=1 // pred_region
      %v61 = vld [vmem:[#allocation5] sm:$0xff]
      %62 = vst [vmem:[#allocation9] sm:$0xff] %v61
    $region29: #{tpu_custom_call.1} parent=1 // pred_fallthru
      _
    %v63 = vld [vmem:[#allocation9] sm:$0xff]
    %v64 = vld [vmem:[#allocation2] sm:$0xff]
    %v65 = vld [vmem:[#allocation7] sm:$0xff]
    %v66 = vld [vmem:[#allocation7 + $0x8] sm:$0xff]
    %v67 = vld [vmem:[#allocation7 + $0x10] sm:$0xff]
    %v68 = vld [vmem:[#allocation7 + $0x18] sm:$0xff]
    %v69 = vld [vmem:[#allocation7 + $0x20] sm:$0xff]
    %v70 = vld [vmem:[#allocation7 + $0x28] sm:$0xff]
    %v71 = vld [vmem:[#allocation7 + $0x30] sm:$0xff]
    %v72 = vld [vmem:[#allocation7 + $0x38] sm:$0xff]
    %v73 = vld [vmem:[#allocation7 + $0x40] sm:$0xff]
    %v74 = vld [vmem:[#allocation7 + $0x48] sm:$0xff]
    %v75 = vld [vmem:[#allocation7 + $0x50] sm:$0xff]
    %v76 = vld [vmem:[#allocation7 + $0x58] sm:$0xff]
    %v77 = vld [vmem:[#allocation7 + $0x60] sm:$0xff]
    %v78 = vld [vmem:[#allocation7 + $0x68] sm:$0xff]
    %v79 = vld [vmem:[#allocation7 + $0x70] sm:$0xff]
    %v80 = vld [vmem:[#allocation7 + $0x78] sm:$0xff]
    %81 = vmatprep.subr.mxu0 0.0
    %v82 = vand.u32 %v65, 4294901760
    %83 = vmatpush1.msra.mxu0 %v82
    %84 = vmatprep.subr.mxu0 0.0
    %v85 = vand.u32 %v66, 4294901760
    %86 = vmatpush1.msra.mxu0 %v85
    %87 = vmatprep.subr.mxu0 0.0
    %v88 = vand.u32 %v67, 4294901760
    %89 = vmatpush1.msra.mxu0 %v88
    %90 = vmatprep.subr.mxu0 0.0
    %v91 = vand.u32 %v68, 4294901760
    %92 = vmatpush1.msra.mxu0 %v91
    %93 = vmatprep.subr.mxu0 0.0
    %v94 = vand.u32 %v69, 4294901760
    %95 = vmatpush1.msra.mxu0 %v94
    %96 = vmatprep.subr.mxu0 0.0
    %v97 = vand.u32 %v70, 4294901760
    %98 = vmatpush1.msra.mxu0 %v97
    %99 = vmatprep.subr.mxu0 0.0
    %v100 = vand.u32 %v71, 4294901760
    %101 = vmatpush1.msra.mxu0 %v100
    %102 = vmatprep.subr.mxu0 0.0
    %v103 = vand.u32 %v72, 4294901760
    %104 = vmatpush1.msra.mxu0 %v103
    %105 = vmatprep.subr.mxu0 0.0
    %v106 = vand.u32 %v73, 4294901760
    %107 = vmatpush1.msra.mxu0 %v106
    %108 = vmatprep.subr.mxu0 0.0
    %v109 = vand.u32 %v74, 4294901760
    %110 = vmatpush1.msra.mxu0 %v109
    %111 = vmatprep.subr.mxu0 0.0
    %v112 = vand.u32 %v75, 4294901760
    %113 = vmatpush1.msra.mxu0 %v112
    %114 = vmatprep.subr.mxu0 0.0
    %v115 = vand.u32 %v76, 4294901760
    %116 = vmatpush1.msra.mxu0 %v115
    %117 = vmatprep.subr.mxu0 0.0
    %v118 = vand.u32 %v77, 4294901760
    %119 = vmatpush1.msra.mxu0 %v118
    %120 = vmatprep.subr.mxu0 0.0
    %v121 = vand.u32 %v78, 4294901760
    %122 = vmatpush1.msra.mxu0 %v121
    %123 = vmatprep.subr.mxu0 0.0
    %v124 = vand.u32 %v79, 4294901760
    %125 = vmatpush1.msra.mxu0 %v124
    %126 = vmatprep.subr.mxu0 0.0
    %v127 = vand.u32 %v80, 4294901760
    %128 = vmatpush1.msra.mxu0 %v127
    %129 = vmatprep.subr.mxu0 0.0
    %130 = vmatpush1.msra.mxu0 0.0
    %131 = vmatprep.subr.mxu0 0.0
    %132 = vmatpush1.msra.mxu0 0.0
    %133 = vmatprep.subr.mxu0 0.0
    %134 = vmatpush1.msra.mxu0 0.0
    %135 = vmatprep.subr.mxu0 0.0
    %136 = vmatpush1.msra.mxu0 0.0
    %137 = vmatprep.subr.mxu0 0.0
    %138 = vmatpush1.msra.mxu0 0.0
    %139 = vmatprep.subr.mxu0 0.0
    %140 = vmatpush1.msra.mxu0 0.0
    %141 = vmatprep.subr.mxu0 0.0
    %142 = vmatpush1.msra.mxu0 0.0
    %143 = vmatprep.subr.mxu0 0.0
    %144 = vmatpush1.msra.mxu0 0.0
    %145 = vmatprep.subr.mxu0 0.0
    %146 = vmatpush1.msra.mxu0 0.0
    %147 = vmatprep.subr.mxu0 0.0
    %148 = vmatpush1.msra.mxu0 0.0
    %149 = vmatprep.subr.mxu0 0.0
    %150 = vmatpush1.msra.mxu0 0.0
    %151 = vmatprep.subr.mxu0 0.0
    %152 = vmatpush1.msra.mxu0 0.0
    %153 = vmatprep.subr.mxu0 0.0
    %154 = vmatpush1.msra.mxu0 0.0
    %155 = vmatprep.subr.mxu0 0.0
    %156 = vmatpush1.msra.mxu0 0.0
    %157 = vmatprep.subr.mxu0 0.0
    %158 = vmatpush1.msra.mxu0 0.0
    %159 = vmatprep.subr.mxu0 0.0
    %160 = vmatpush1.msra.mxu0 0.0
    %161 = vmatprep.mubr.f32.mxu0 0.0
    %v162 = vand.u32 %v63, 4294901760
    %v163 = vsub.f32 %v63, %v162
    %v164 = vand.u32 %v163, 4294901760
    %v165 = vsub.f32 %v163, %v164
    %v166 = vand.u32 %v165, 4294901760
    %167 = vmatmul.mubr.f32.gmra.mrb[0].mxu0 %v166
    %v168 = vpop.f32.mrb[0].mxu0
    %v169 = vadd.f32 0.0, %v168
    %v170 = vpop.f32.mrb[0].mxu0
    %171 = vdwg.mxu0
    %172 = vmatprep.subr.mxu0 0.0
    %v173 = vand.u32 %v65, 4294901760
    %v174 = vsub.f32 %v65, %v173
    %v175 = vand.u32 %v174, 4294901760
    %v176 = vsub.f32 %v174, %v175
    %v177 = vand.u32 %v176, 4294901760
    %178 = vmatpush1.msra.mxu0 %v177
    %179 = vmatprep.subr.mxu0 0.0
    %v180 = vand.u32 %v66, 4294901760
    %v181 = vsub.f32 %v66, %v180
    %v182 = vand.u32 %v181, 4294901760
    %v183 = vsub.f32 %v181, %v182
    %v184 = vand.u32 %v183, 4294901760
    %185 = vmatpush1.msra.mxu0 %v184
    %186 = vmatprep.subr.mxu0 0.0
    %v187 = vand.u32 %v67, 4294901760
    %v188 = vsub.f32 %v67, %v187
    %v189 = vand.u32 %v188, 4294901760
    %v190 = vsub.f32 %v188, %v189
    %v191 = vand.u32 %v190, 4294901760
    %192 = vmatpush1.msra.mxu0 %v191
    %193 = vmatprep.subr.mxu0 0.0
    %v194 = vand.u32 %v68, 4294901760
    %v195 = vsub.f32 %v68, %v194
    %v196 = vand.u32 %v195, 4294901760
    %v197 = vsub.f32 %v195, %v196
    %v198 = vand.u32 %v197, 4294901760
    %199 = vmatpush1.msra.mxu0 %v198
    %200 = vmatprep.subr.mxu0 0.0
    %v201 = vand.u32 %v69, 4294901760
    %v202 = vsub.f32 %v69, %v201
    %v203 = vand.u32 %v202, 4294901760
    %v204 = vsub.f32 %v202, %v203
    %v205 = vand.u32 %v204, 4294901760
    %206 = vmatpush1.msra.mxu0 %v205
    %207 = vmatprep.subr.mxu0 0.0
    %v208 = vand.u32 %v70, 4294901760
    %v209 = vsub.f32 %v70, %v208
    %v210 = vand.u32 %v209, 4294901760
    %v211 = vsub.f32 %v209, %v210
    %v212 = vand.u32 %v211, 4294901760
    %213 = vmatpush1.msra.mxu0 %v212
    %214 = vmatprep.subr.mxu0 0.0
    %v215 = vand.u32 %v71, 4294901760
    %v216 = vsub.f32 %v71, %v215
    %v217 = vand.u32 %v216, 4294901760
    %v218 = vsub.f32 %v216, %v217
    %v219 = vand.u32 %v218, 4294901760
    %220 = vmatpush1.msra.mxu0 %v219
    %221 = vmatprep.subr.mxu0 0.0
    %v222 = vand.u32 %v72, 4294901760
    %v223 = vsub.f32 %v72, %v222
    %v224 = vand.u32 %v223, 4294901760
    %v225 = vsub.f32 %v223, %v224
    %v226 = vand.u32 %v225, 4294901760
    %227 = vmatpush1.msra.mxu0 %v226
    %228 = vmatprep.subr.mxu0 0.0
    %v229 = vand.u32 %v73, 4294901760
    %v230 = vsub.f32 %v73, %v229
    %v231 = vand.u32 %v230, 4294901760
    %v232 = vsub.f32 %v230, %v231
    %v233 = vand.u32 %v232, 4294901760
    %234 = vmatpush1.msra.mxu0 %v233
    %235 = vmatprep.subr.mxu0 0.0
    %v236 = vand.u32 %v74, 4294901760
    %v237 = vsub.f32 %v74, %v236
    %v238 = vand.u32 %v237, 4294901760
    %v239 = vsub.f32 %v237, %v238
    %v240 = vand.u32 %v239, 4294901760
    %241 = vmatpush1.msra.mxu0 %v240
    %242 = vmatprep.subr.mxu0 0.0
    %v243 = vand.u32 %v75, 4294901760
    %v244 = vsub.f32 %v75, %v243
    %v245 = vand.u32 %v244, 4294901760
    %v246 = vsub.f32 %v244, %v245
    %v247 = vand.u32 %v246, 4294901760
    %248 = vmatpush1.msra.mxu0 %v247
    %249 = vmatprep.subr.mxu0 0.0
    %v250 = vand.u32 %v76, 4294901760
    %v251 = vsub.f32 %v76, %v250
    %v252 = vand.u32 %v251, 4294901760
    %v253 = vsub.f32 %v251, %v252
    %v254 = vand.u32 %v253, 4294901760
    %255 = vmatpush1.msra.mxu0 %v254
    %256 = vmatprep.subr.mxu0 0.0
    %v257 = vand.u32 %v77, 4294901760
    %v258 = vsub.f32 %v77, %v257
    %v259 = vand.u32 %v258, 4294901760
    %v260 = vsub.f32 %v258, %v259
    %v261 = vand.u32 %v260, 4294901760
    %262 = vmatpush1.msra.mxu0 %v261
    %263 = vmatprep.subr.mxu0 0.0
    %v264 = vand.u32 %v78, 4294901760
    %v265 = vsub.f32 %v78, %v264
    %v266 = vand.u32 %v265, 4294901760
    %v267 = vsub.f32 %v265, %v266
    %v268 = vand.u32 %v267, 4294901760
    %269 = vmatpush1.msra.mxu0 %v268
    %270 = vmatprep.subr.mxu0 0.0
    %v271 = vand.u32 %v79, 4294901760
    %v272 = vsub.f32 %v79, %v271
    %v273 = vand.u32 %v272, 4294901760
    %v274 = vsub.f32 %v272, %v273
    %v275 = vand.u32 %v274, 4294901760
    %276 = vmatpush1.msra.mxu0 %v275
    %277 = vmatprep.subr.mxu0 0.0
    %v278 = vand.u32 %v80, 4294901760
    %v279 = vsub.f32 %v80, %v278
    %v280 = vand.u32 %v279, 4294901760
    %v281 = vsub.f32 %v279, %v280
    %v282 = vand.u32 %v281, 4294901760
    %283 = vmatpush1.msra.mxu0 %v282
    %284 = vmatprep.subr.mxu0 0.0
    %285 = vmatpush1.msra.mxu0 0.0
    %286 = vmatprep.subr.mxu0 0.0
    %287 = vmatpush1.msra.mxu0 0.0
    %288 = vmatprep.subr.mxu0 0.0
    %289 = vmatpush1.msra.mxu0 0.0
    %290 = vmatprep.subr.mxu0 0.0
    %291 = vmatpush1.msra.mxu0 0.0
    %292 = vmatprep.subr.mxu0 0.0
    %293 = vmatpush1.msra.mxu0 0.0
    %294 = vmatprep.subr.mxu0 0.0
    %295 = vmatpush1.msra.mxu0 0.0
    %296 = vmatprep.subr.mxu0 0.0
    %297 = vmatpush1.msra.mxu0 0.0
    %298 = vmatprep.subr.mxu0 0.0
    %299 = vmatpush1.msra.mxu0 0.0
    %300 = vmatprep.subr.mxu0 0.0
    %301 = vmatpush1.msra.mxu0 0.0
    %302 = vmatprep.subr.mxu0 0.0
    %303 = vmatpush1.msra.mxu0 0.0
    %304 = vmatprep.subr.mxu0 0.0
    %305 = vmatpush1.msra.mxu0 0.0
    %306 = vmatprep.subr.mxu0 0.0
    %307 = vmatpush1.msra.mxu0 0.0
    %308 = vmatprep.subr.mxu0 0.0
    %309 = vmatpush1.msra.mxu0 0.0
    %310 = vmatprep.subr.mxu0 0.0
    %311 = vmatpush1.msra.mxu0 0.0
    %312 = vmatprep.subr.mxu0 0.0
    %313 = vmatpush1.msra.mxu0 0.0
    %314 = vmatprep.subr.mxu0 0.0
    %315 = vmatpush1.msra.mxu0 0.0
    %316 = vmatprep.mubr.f32.mxu0 0.0
    %v317 = vand.u32 %v63, 4294901760
    %318 = vmatmul.mubr.f32.gmra.mrb[0].mxu0 %v317
    %v319 = vpop.f32.mrb[0].mxu0
    %v320 = vadd.f32 %v169, %v319
    %v321 = vpop.f32.mrb[0].mxu0
    %322 = vdwg.mxu0
    %323 = vmatprep.subr.mxu0 0.0
    %v324 = vand.u32 %v65, 4294901760
    %v325 = vsub.f32 %v65, %v324
    %326 = vmatpush1.msra.mxu0 %v325
    %327 = vmatprep.subr.mxu0 0.0
    %v328 = vand.u32 %v66, 4294901760
    %v329 = vsub.f32 %v66, %v328
    %330 = vmatpush1.msra.mxu0 %v329
    %331 = vmatprep.subr.mxu0 0.0
    %v332 = vand.u32 %v67, 4294901760
    %v333 = vsub.f32 %v67, %v332
    %334 = vmatpush1.msra.mxu0 %v333
    %335 = vmatprep.subr.mxu0 0.0
    %v336 = vand.u32 %v68, 4294901760
    %v337 = vsub.f32 %v68, %v336
    %338 = vmatpush1.msra.mxu0 %v337
    %339 = vmatprep.subr.mxu0 0.0
    %v340 = vand.u32 %v69, 4294901760
    %v341 = vsub.f32 %v69, %v340
    %342 = vmatpush1.msra.mxu0 %v341
    %343 = vmatprep.subr.mxu0 0.0
    %v344 = vand.u32 %v70, 4294901760
    %v345 = vsub.f32 %v70, %v344
    %346 = vmatpush1.msra.mxu0 %v345
    %347 = vmatprep.subr.mxu0 0.0
    %v348 = vand.u32 %v71, 4294901760
    %v349 = vsub.f32 %v71, %v348
    %350 = vmatpush1.msra.mxu0 %v349
    %351 = vmatprep.subr.mxu0 0.0
    %v352 = vand.u32 %v72, 4294901760
    %v353 = vsub.f32 %v72, %v352
    %354 = vmatpush1.msra.mxu0 %v353
    %355 = vmatprep.subr.mxu0 0.0
    %v356 = vand.u32 %v73, 4294901760
    %v357 = vsub.f32 %v73, %v356
    %358 = vmatpush1.msra.mxu0 %v357
    %359 = vmatprep.subr.mxu0 0.0
    %v360 = vand.u32 %v74, 4294901760
    %v361 = vsub.f32 %v74, %v360
    %362 = vmatpush1.msra.mxu0 %v361
    %363 = vmatprep.subr.mxu0 0.0
    %v364 = vand.u32 %v75, 4294901760
    %v365 = vsub.f32 %v75, %v364
    %366 = vmatpush1.msra.mxu0 %v365
    %367 = vmatprep.subr.mxu0 0.0
    %v368 = vand.u32 %v76, 4294901760
    %v369 = vsub.f32 %v76, %v368
    %370 = vmatpush1.msra.mxu0 %v369
    %371 = vmatprep.subr.mxu0 0.0
    %v372 = vand.u32 %v77, 4294901760
    %v373 = vsub.f32 %v77, %v372
    %374 = vmatpush1.msra.mxu0 %v373
    %375 = vmatprep.subr.mxu0 0.0
    %v376 = vand.u32 %v78, 4294901760
    %v377 = vsub.f32 %v78, %v376
    %378 = vmatpush1.msra.mxu0 %v377
    %379 = vmatprep.subr.mxu0 0.0
    %v380 = vand.u32 %v79, 4294901760
    %v381 = vsub.f32 %v79, %v380
    %382 = vmatpush1.msra.mxu0 %v381
    %383 = vmatprep.subr.mxu0 0.0
    %v384 = vand.u32 %v80, 4294901760
    %v385 = vsub.f32 %v80, %v384
    %386 = vmatpush1.msra.mxu0 %v385
    %387 = vmatprep.subr.mxu0 0.0
    %388 = vmatpush1.msra.mxu0 0.0
    %389 = vmatprep.subr.mxu0 0.0
    %390 = vmatpush1.msra.mxu0 0.0
    %391 = vmatprep.subr.mxu0 0.0
    %392 = vmatpush1.msra.mxu0 0.0
    %393 = vmatprep.subr.mxu0 0.0
    %394 = vmatpush1.msra.mxu0 0.0
    %395 = vmatprep.subr.mxu0 0.0
    %396 = vmatpush1.msra.mxu0 0.0
    %397 = vmatprep.subr.mxu0 0.0
    %398 = vmatpush1.msra.mxu0 0.0
    %399 = vmatprep.subr.mxu0 0.0
    %400 = vmatpush1.msra.mxu0 0.0
    %401 = vmatprep.subr.mxu0 0.0
    %402 = vmatpush1.msra.mxu0 0.0
    %403 = vmatprep.subr.mxu0 0.0
    %404 = vmatpush1.msra.mxu0 0.0
    %405 = vmatprep.subr.mxu0 0.0
    %406 = vmatpush1.msra.mxu0 0.0
    %407 = vmatprep.subr.mxu0 0.0
    %408 = vmatpush1.msra.mxu0 0.0
    %409 = vmatprep.subr.mxu0 0.0
    %410 = vmatpush1.msra.mxu0 0.0
    %411 = vmatprep.subr.mxu0 0.0
    %412 = vmatpush1.msra.mxu0 0.0
    %413 = vmatprep.subr.mxu0 0.0
    %414 = vmatpush1.msra.mxu0 0.0
    %415 = vmatprep.subr.mxu0 0.0
    %416 = vmatpush1.msra.mxu0 0.0
    %417 = vmatprep.subr.mxu0 0.0
    %418 = vmatpush1.msra.mxu0 0.0
    %419 = vmatprep.mubr.f32.mxu0 0.0
    %v420 = vand.u32 %v63, 4294901760
    %v421 = vsub.f32 %v63, %v420
    %422 = vmatmul.mubr.f32.gmra.mrb[0].mxu0 %v421
    %v423 = vpop.f32.mrb[0].mxu0
    %v424 = vadd.f32 %v320, %v423
    %v425 = vpop.f32.mrb[0].mxu0
    %426 = vdwg.mxu0
    %427 = vmatprep.subr.mxu0 0.0
    %v428 = vand.u32 %v65, 4294901760
    %429 = vmatpush1.msra.mxu0 %v428
    %430 = vmatprep.subr.mxu0 0.0
    %v431 = vand.u32 %v66, 4294901760
    %432 = vmatpush1.msra.mxu0 %v431
    %433 = vmatprep.subr.mxu0 0.0
    %v434 = vand.u32 %v67, 4294901760
    %435 = vmatpush1.msra.mxu0 %v434
    %436 = vmatprep.subr.mxu0 0.0
    %v437 = vand.u32 %v68, 4294901760
    %438 = vmatpush1.msra.mxu0 %v437
    %439 = vmatprep.subr.mxu0 0.0
    %v440 = vand.u32 %v69, 4294901760
    %441 = vmatpush1.msra.mxu0 %v440
    %442 = vmatprep.subr.mxu0 0.0
    %v443 = vand.u32 %v70, 4294901760
    %444 = vmatpush1.msra.mxu0 %v443
    %445 = vmatprep.subr.mxu0 0.0
    %v446 = vand.u32 %v71, 4294901760
    %447 = vmatpush1.msra.mxu0 %v446
    %448 = vmatprep.subr.mxu0 0.0
    %v449 = vand.u32 %v72, 4294901760
    %450 = vmatpush1.msra.mxu0 %v449
    %451 = vmatprep.subr.mxu0 0.0
    %v452 = vand.u32 %v73, 4294901760
    %453 = vmatpush1.msra.mxu0 %v452
    %454 = vmatprep.subr.mxu0 0.0
    %v455 = vand.u32 %v74, 4294901760
    %456 = vmatpush1.msra.mxu0 %v455
    %457 = vmatprep.subr.mxu0 0.0
    %v458 = vand.u32 %v75, 4294901760
    %459 = vmatpush1.msra.mxu0 %v458
    %460 = vmatprep.subr.mxu0 0.0
    %v461 = vand.u32 %v76, 4294901760
    %462 = vmatpush1.msra.mxu0 %v461
    %463 = vmatprep.subr.mxu0 0.0
    %v464 = vand.u32 %v77, 4294901760
    %465 = vmatpush1.msra.mxu0 %v464
    %466 = vmatprep.subr.mxu0 0.0
    %v467 = vand.u32 %v78, 4294901760
    %468 = vmatpush1.msra.mxu0 %v467
    %469 = vmatprep.subr.mxu0 0.0
    %v470 = vand.u32 %v79, 4294901760
    %471 = vmatpush1.msra.mxu0 %v470
    %472 = vmatprep.subr.mxu0 0.0
    %v473 = vand.u32 %v80, 4294901760
    %474 = vmatpush1.msra.mxu0 %v473
    %475 = vmatprep.subr.mxu0 0.0
    %476 = vmatpush1.msra.mxu0 0.0
    %477 = vmatprep.subr.mxu0 0.0
    %478 = vmatpush1.msra.mxu0 0.0
    %479 = vmatprep.subr.mxu0 0.0
    %480 = vmatpush1.msra.mxu0 0.0
    %481 = vmatprep.subr.mxu0 0.0
    %482 = vmatpush1.msra.mxu0 0.0
    %483 = vmatprep.subr.mxu0 0.0
    %484 = vmatpush1.msra.mxu0 0.0
    %485 = vmatprep.subr.mxu0 0.0
    %486 = vmatpush1.msra.mxu0 0.0
    %487 = vmatprep.subr.mxu0 0.0
    %488 = vmatpush1.msra.mxu0 0.0
    %489 = vmatprep.subr.mxu0 0.0
    %490 = vmatpush1.msra.mxu0 0.0
    %491 = vmatprep.subr.mxu0 0.0
    %492 = vmatpush1.msra.mxu0 0.0
    %493 = vmatprep.subr.mxu0 0.0
    %494 = vmatpush1.msra.mxu0 0.0
    %495 = vmatprep.subr.mxu0 0.0
    %496 = vmatpush1.msra.mxu0 0.0
    %497 = vmatprep.subr.mxu0 0.0
    %498 = vmatpush1.msra.mxu0 0.0
    %499 = vmatprep.subr.mxu0 0.0
    %500 = vmatpush1.msra.mxu0 0.0
    %501 = vmatprep.subr.mxu0 0.0
    %502 = vmatpush1.msra.mxu0 0.0
    %503 = vmatprep.subr.mxu0 0.0
    %504 = vmatpush1.msra.mxu0 0.0
    %505 = vmatprep.subr.mxu0 0.0
    %506 = vmatpush1.msra.mxu0 0.0
    %507 = vmatprep.mubr.f32.mxu0 0.0
    %v508 = vand.u32 %v63, 4294901760
    %v509 = vsub.f32 %v63, %v508
    %v510 = vand.u32 %v509, 4294901760
    %511 = vmatmul.mubr.f32.gmra.mrb[0].mxu0 %v510
    %v512 = vpop.f32.mrb[0].mxu0
    %v513 = vadd.f32 %v424, %v512
    %v514 = vpop.f32.mrb[0].mxu0
    %515 = vdwg.mxu0
    %516 = vmatprep.subr.mxu0 0.0
    %v517 = vand.u32 %v65, 4294901760
    %v518 = vsub.f32 %v65, %v517
    %v519 = vand.u32 %v518, 4294901760
    %520 = vmatpush1.msra.mxu0 %v519
    %521 = vmatprep.subr.mxu0 0.0
    %v522 = vand.u32 %v66, 4294901760
    %v523 = vsub.f32 %v66, %v522
    %v524 = vand.u32 %v523, 4294901760
    %525 = vmatpush1.msra.mxu0 %v524
    %526 = vmatprep.subr.mxu0 0.0
    %v527 = vand.u32 %v67, 4294901760
    %v528 = vsub.f32 %v67, %v527
    %v529 = vand.u32 %v528, 4294901760
    %530 = vmatpush1.msra.mxu0 %v529
    %531 = vmatprep.subr.mxu0 0.0
    %v532 = vand.u32 %v68, 4294901760
    %v533 = vsub.f32 %v68, %v532
    %v534 = vand.u32 %v533, 4294901760
    %535 = vmatpush1.msra.mxu0 %v534
    %536 = vmatprep.subr.mxu0 0.0
    %v537 = vand.u32 %v69, 4294901760
    %v538 = vsub.f32 %v69, %v537
    %v539 = vand.u32 %v538, 4294901760
    %540 = vmatpush1.msra.mxu0 %v539
    %541 = vmatprep.subr.mxu0 0.0
    %v542 = vand.u32 %v70, 4294901760
    %v543 = vsub.f32 %v70, %v542
    %v544 = vand.u32 %v543, 4294901760
    %545 = vmatpush1.msra.mxu0 %v544
    %546 = vmatprep.subr.mxu0 0.0
    %v547 = vand.u32 %v71, 4294901760
    %v548 = vsub.f32 %v71, %v547
    %v549 = vand.u32 %v548, 4294901760
    %550 = vmatpush1.msra.mxu0 %v549
    %551 = vmatprep.subr.mxu0 0.0
    %v552 = vand.u32 %v72, 4294901760
    %v553 = vsub.f32 %v72, %v552
    %v554 = vand.u32 %v553, 4294901760
    %555 = vmatpush1.msra.mxu0 %v554
    %556 = vmatprep.subr.mxu0 0.0
    %v557 = vand.u32 %v73, 4294901760
    %v558 = vsub.f32 %v73, %v557
    %v559 = vand.u32 %v558, 4294901760
    %560 = vmatpush1.msra.mxu0 %v559
    %561 = vmatprep.subr.mxu0 0.0
    %v562 = vand.u32 %v74, 4294901760
    %v563 = vsub.f32 %v74, %v562
    %v564 = vand.u32 %v563, 4294901760
    %565 = vmatpush1.msra.mxu0 %v564
    %566 = vmatprep.subr.mxu0 0.0
    %v567 = vand.u32 %v75, 4294901760
    %v568 = vsub.f32 %v75, %v567
    %v569 = vand.u32 %v568, 4294901760
    %570 = vmatpush1.msra.mxu0 %v569
    %571 = vmatprep.subr.mxu0 0.0
    %v572 = vand.u32 %v76, 4294901760
    %v573 = vsub.f32 %v76, %v572
    %v574 = vand.u32 %v573, 4294901760
    %575 = vmatpush1.msra.mxu0 %v574
    %576 = vmatprep.subr.mxu0 0.0
    %v577 = vand.u32 %v77, 4294901760
    %v578 = vsub.f32 %v77, %v577
    %v579 = vand.u32 %v578, 4294901760
    %580 = vmatpush1.msra.mxu0 %v579
    %581 = vmatprep.subr.mxu0 0.0
    %v582 = vand.u32 %v78, 4294901760
    %v583 = vsub.f32 %v78, %v582
    %v584 = vand.u32 %v583, 4294901760
    %585 = vmatpush1.msra.mxu0 %v584
    %586 = vmatprep.subr.mxu0 0.0
    %v587 = vand.u32 %v79, 4294901760
    %v588 = vsub.f32 %v79, %v587
    %v589 = vand.u32 %v588, 4294901760
    %590 = vmatpush1.msra.mxu0 %v589
    %591 = vmatprep.subr.mxu0 0.0
    %v592 = vand.u32 %v80, 4294901760
    %v593 = vsub.f32 %v80, %v592
    %v594 = vand.u32 %v593, 4294901760
    %595 = vmatpush1.msra.mxu0 %v594
    %596 = vmatprep.subr.mxu0 0.0
    %597 = vmatpush1.msra.mxu0 0.0
    %598 = vmatprep.subr.mxu0 0.0
    %599 = vmatpush1.msra.mxu0 0.0
    %600 = vmatprep.subr.mxu0 0.0
    %601 = vmatpush1.msra.mxu0 0.0
    %602 = vmatprep.subr.mxu0 0.0
    %603 = vmatpush1.msra.mxu0 0.0
    %604 = vmatprep.subr.mxu0 0.0
    %605 = vmatpush1.msra.mxu0 0.0
    %606 = vmatprep.subr.mxu0 0.0
    %607 = vmatpush1.msra.mxu0 0.0
    %608 = vmatprep.subr.mxu0 0.0
    %609 = vmatpush1.msra.mxu0 0.0
    %610 = vmatprep.subr.mxu0 0.0
    %611 = vmatpush1.msra.mxu0 0.0
    %612 = vmatprep.subr.mxu0 0.0
    %613 = vmatpush1.msra.mxu0 0.0
    %614 = vmatprep.subr.mxu0 0.0
    %615 = vmatpush1.msra.mxu0 0.0
    %616 = vmatprep.subr.mxu0 0.0
    %617 = vmatpush1.msra.mxu0 0.0
    %618 = vmatprep.subr.mxu0 0.0
    %619 = vmatpush1.msra.mxu0 0.0
    %620 = vmatprep.subr.mxu0 0.0
    %621 = vmatpush1.msra.mxu0 0.0
    %622 = vmatprep.subr.mxu0 0.0
    %623 = vmatpush1.msra.mxu0 0.0
    %624 = vmatprep.subr.mxu0 0.0
    %625 = vmatpush1.msra.mxu0 0.0
    %626 = vmatprep.subr.mxu0 0.0
    %627 = vmatpush1.msra.mxu0 0.0
    %628 = vmatprep.mubr.f32.mxu0 0.0
    %v629 = vand.u32 %v63, 4294901760
    %630 = vmatmul.mubr.f32.gmra.mrb[0].mxu0 %v629
    %v631 = vpop.f32.mrb[0].mxu0
    %v632 = vadd.f32 %v513, %v631
    %v633 = vpop.f32.mrb[0].mxu0
    %634 = vdwg.mxu0
    %635 = vmatprep.subr.mxu0 0.0
    %v636 = vand.u32 %v65, 4294901760
    %637 = vmatpush1.msra.mxu0 %v636
    %638 = vmatprep.subr.mxu0 0.0
    %v639 = vand.u32 %v66, 4294901760
    %640 = vmatpush1.msra.mxu0 %v639
    %641 = vmatprep.subr.mxu0 0.0
    %v642 = vand.u32 %v67, 4294901760
    %643 = vmatpush1.msra.mxu0 %v642
    %644 = vmatprep.subr.mxu0 0.0
    %v645 = vand.u32 %v68, 4294901760
    %646 = vmatpush1.msra.mxu0 %v645
    %647 = vmatprep.subr.mxu0 0.0
    %v648 = vand.u32 %v69, 4294901760
    %649 = vmatpush1.msra.mxu0 %v648
    %650 = vmatprep.subr.mxu0 0.0
    %v651 = vand.u32 %v70, 4294901760
    %652 = vmatpush1.msra.mxu0 %v651
    %653 = vmatprep.subr.mxu0 0.0
    %v654 = vand.u32 %v71, 4294901760
    %655 = vmatpush1.msra.mxu0 %v654
    %656 = vmatprep.subr.mxu0 0.0
    %v657 = vand.u32 %v72, 4294901760
    %658 = vmatpush1.msra.mxu0 %v657
    %659 = vmatprep.subr.mxu0 0.0
    %v660 = vand.u32 %v73, 4294901760
    %661 = vmatpush1.msra.mxu0 %v660
    %662 = vmatprep.subr.mxu0 0.0
    %v663 = vand.u32 %v74, 4294901760
    %664 = vmatpush1.msra.mxu0 %v663
    %665 = vmatprep.subr.mxu0 0.0
    %v666 = vand.u32 %v75, 4294901760
    %667 = vmatpush1.msra.mxu0 %v666
    %668 = vmatprep.subr.mxu0 0.0
    %v669 = vand.u32 %v76, 4294901760
    %670 = vmatpush1.msra.mxu0 %v669
    %671 = vmatprep.subr.mxu0 0.0
    %v672 = vand.u32 %v77, 4294901760
    %673 = vmatpush1.msra.mxu0 %v672
    %674 = vmatprep.subr.mxu0 0.0
    %v675 = vand.u32 %v78, 4294901760
    %676 = vmatpush1.msra.mxu0 %v675
    %677 = vmatprep.subr.mxu0 0.0
    %v678 = vand.u32 %v79, 4294901760
    %679 = vmatpush1.msra.mxu0 %v678
    %680 = vmatprep.subr.mxu0 0.0
    %v681 = vand.u32 %v80, 4294901760
    %682 = vmatpush1.msra.mxu0 %v681
    %683 = vmatprep.subr.mxu0 0.0
    %684 = vmatpush1.msra.mxu0 0.0
    %685 = vmatprep.subr.mxu0 0.0
    %686 = vmatpush1.msra.mxu0 0.0
    %687 = vmatprep.subr.mxu0 0.0
    %688 = vmatpush1.msra.mxu0 0.0
    %689 = vmatprep.subr.mxu0 0.0
    %690 = vmatpush1.msra.mxu0 0.0
    %691 = vmatprep.subr.mxu0 0.0
    %692 = vmatpush1.msra.mxu0 0.0
    %693 = vmatprep.subr.mxu0 0.0
    %694 = vmatpush1.msra.mxu0 0.0
    %695 = vmatprep.subr.mxu0 0.0
    %696 = vmatpush1.msra.mxu0 0.0
    %697 = vmatprep.subr.mxu0 0.0
    %698 = vmatpush1.msra.mxu0 0.0
    %699 = vmatprep.subr.mxu0 0.0
    %700 = vmatpush1.msra.mxu0 0.0
    %701 = vmatprep.subr.mxu0 0.0
    %702 = vmatpush1.msra.mxu0 0.0
    %703 = vmatprep.subr.mxu0 0.0
    %704 = vmatpush1.msra.mxu0 0.0
    %705 = vmatprep.subr.mxu0 0.0
    %706 = vmatpush1.msra.mxu0 0.0
    %707 = vmatprep.subr.mxu0 0.0
    %708 = vmatpush1.msra.mxu0 0.0
    %709 = vmatprep.subr.mxu0 0.0
    %710 = vmatpush1.msra.mxu0 0.0
    %711 = vmatprep.subr.mxu0 0.0
    %712 = vmatpush1.msra.mxu0 0.0
    %713 = vmatprep.subr.mxu0 0.0
    %714 = vmatpush1.msra.mxu0 0.0
    %715 = vmatprep.mubr.f32.mxu0 0.0
    %v716 = vand.u32 %v63, 4294901760
    %717 = vmatmul.mubr.f32.gmra.mrb[0].mxu0 %v716
    %v718 = vpop.f32.mrb[0].mxu0
    %v719 = vadd.f32 %v632, %v718
    %v720 = vpop.f32.mrb[0].mxu0
    %721 = vdwg.mxu0
    %v722 = vadd.f32 %v64, %v719
    %v723 = vtanh.pop %v722
    %724 = vst [vmem:[#allocation8] sm:$0xff] %v723
    %s725 = scalar_lea.vmem [#allocation2], 8
    %v726 = vld [vmem:[%s725] sm:$0xff]
    %v727 = vld [vmem:[#allocation7] sm:$0xff]
    %v728 = vld [vmem:[#allocation7 + $0x8] sm:$0xff]
    %v729 = vld [vmem:[#allocation7 + $0x10] sm:$0xff]
    %v730 = vld [vmem:[#allocation7 + $0x18] sm:$0xff]
    %v731 = vld [vmem:[#allocation7 + $0x20] sm:$0xff]
    %v732 = vld [vmem:[#allocation7 + $0x28] sm:$0xff]
    %v733 = vld [vmem:[#allocation7 + $0x30] sm:$0xff]
    %v734 = vld [vmem:[#allocation7 + $0x38] sm:$0xff]
    %v735 = vld [vmem:[#allocation7 + $0x40] sm:$0xff]
    %v736 = vld [vmem:[#allocation7 + $0x48] sm:$0xff]
    %v737 = vld [vmem:[#allocation7 + $0x50] sm:$0xff]
    %v738 = vld [vmem:[#allocation7 + $0x58] sm:$0xff]
    %v739 = vld [vmem:[#allocation7 + $0x60] sm:$0xff]
    %v740 = vld [vmem:[#allocation7 + $0x68] sm:$0xff]
    %v741 = vld [vmem:[#allocation7 + $0x70] sm:$0xff]
    %v742 = vld [vmem:[#allocation7 + $0x78] sm:$0xff]
    %743 = vmatprep.subr.mxu0 0.0
    %v744 = vand.u32 %v727, 4294901760
    %745 = vmatpush1.msra.mxu0 %v744
    %746 = vmatprep.subr.mxu0 0.0
    %v747 = vand.u32 %v728, 4294901760
    %748 = vmatpush1.msra.mxu0 %v747
    %749 = vmatprep.subr.mxu0 0.0
    %v750 = vand.u32 %v729, 4294901760
    %751 = vmatpush1.msra.mxu0 %v750
    %752 = vmatprep.subr.mxu0 0.0
    %v753 = vand.u32 %v730, 4294901760
    %754 = vmatpush1.msra.mxu0 %v753
    %755 = vmatprep.subr.mxu0 0.0
    %v756 = vand.u32 %v731, 4294901760
    %757 = vmatpush1.msra.mxu0 %v756
    %758 = vmatprep.subr.mxu0 0.0
    %v759 = vand.u32 %v732, 4294901760
    %760 = vmatpush1.msra.mxu0 %v759
    %761 = vmatprep.subr.mxu0 0.0
    %v762 = vand.u32 %v733, 4294901760
    %763 = vmatpush1.msra.mxu0 %v762
    %764 = vmatprep.subr.mxu0 0.0
    %v765 = vand.u32 %v734, 4294901760
    %766 = vmatpush1.msra.mxu0 %v765
    %767 = vmatprep.subr.mxu0 0.0
    %v768 = vand.u32 %v735, 4294901760
    %769 = vmatpush1.msra.mxu0 %v768
    %770 = vmatprep.subr.mxu0 0.0
    %v771 = vand.u32 %v736, 4294901760
    %772 = vmatpush1.msra.mxu0 %v771
    %773 = vmatprep.subr.mxu0 0.0
    %v774 = vand.u32 %v737, 4294901760
    %775 = vmatpush1.msra.mxu0 %v774
    %776 = vmatprep.subr.mxu0 0.0
    %v777 = vand.u32 %v738, 4294901760
    %778 = vmatpush1.msra.mxu0 %v777
    %779 = vmatprep.subr.mxu0 0.0
    %v780 = vand.u32 %v739, 4294901760
    %781 = vmatpush1.msra.mxu0 %v780
    %782 = vmatprep.subr.mxu0 0.0
    %v783 = vand.u32 %v740, 4294901760
    %784 = vmatpush1.msra.mxu0 %v783
    %785 = vmatprep.subr.mxu0 0.0
    %v786 = vand.u32 %v741, 4294901760
    %787 = vmatpush1.msra.mxu0 %v786
    %788 = vmatprep.subr.mxu0 0.0
    %v789 = vand.u32 %v742, 4294901760
    %790 = vmatpush1.msra.mxu0 %v789
    %791 = vmatprep.subr.mxu0 0.0
    %792 = vmatpush1.msra.mxu0 0.0
    %793 = vmatprep.subr.mxu0 0.0
    %794 = vmatpush1.msra.mxu0 0.0
    %795 = vmatprep.subr.mxu0 0.0
    %796 = vmatpush1.msra.mxu0 0.0
    %797 = vmatprep.subr.mxu0 0.0
    %798 = vmatpush1.msra.mxu0 0.0
    %799 = vmatprep.subr.mxu0 0.0
    %800 = vmatpush1.msra.mxu0 0.0
    %801 = vmatprep.subr.mxu0 0.0
    %802 = vmatpush1.msra.mxu0 0.0
    %803 = vmatprep.subr.mxu0 0.0
    %804 = vmatpush1.msra.mxu0 0.0
    %805 = vmatprep.subr.mxu0 0.0
    %806 = vmatpush1.msra.mxu0 0.0
    %807 = vmatprep.subr.mxu0 0.0
    %808 = vmatpush1.msra.mxu0 0.0
    %809 = vmatprep.subr.mxu0 0.0
    %810 = vmatpush1.msra.mxu0 0.0
    %811 = vmatprep.subr.mxu0 0.0
    %812 = vmatpush1.msra.mxu0 0.0
    %813 = vmatprep.subr.mxu0 0.0
    %814 = vmatpush1.msra.mxu0 0.0
    %815 = vmatprep.subr.mxu0 0.0
    %816 = vmatpush1.msra.mxu0 0.0
    %817 = vmatprep.subr.mxu0 0.0
    %818 = vmatpush1.msra.mxu0 0.0
    %819 = vmatprep.subr.mxu0 0.0
    %820 = vmatpush1.msra.mxu0 0.0
    %821 = vmatprep.subr.mxu0 0.0
    %822 = vmatpush1.msra.mxu0 0.0
    %823 = vmatprep.mubr.f32.mxu0 0.0
    %v824 = vand.u32 %v723, 4294901760
    %v825 = vsub.f32 %v723, %v824
    %v826 = vand.u32 %v825, 4294901760
    %v827 = vsub.f32 %v825, %v826
    %v828 = vand.u32 %v827, 4294901760
    %829 = vmatmul.mubr.f32.gmra.mrb[0].mxu0 %v828
    %v830 = vpop.f32.mrb[0].mxu0
    %v831 = vadd.f32 0.0, %v830
    %v832 = vpop.f32.mrb[0].mxu0
    %833 = vdwg.mxu0
    %834 = vmatprep.subr.mxu0 0.0
    %v835 = vand.u32 %v727, 4294901760
    %v836 = vsub.f32 %v727, %v835
    %v837 = vand.u32 %v836, 4294901760
    %v838 = vsub.f32 %v836, %v837
    %v839 = vand.u32 %v838, 4294901760
    %840 = vmatpush1.msra.mxu0 %v839
    %841 = vmatprep.subr.mxu0 0.0
    %v842 = vand.u32 %v728, 4294901760
    %v843 = vsub.f32 %v728, %v842
    %v844 = vand.u32 %v843, 4294901760
    %v845 = vsub.f32 %v843, %v844
    %v846 = vand.u32 %v845, 4294901760
    %847 = vmatpush1.msra.mxu0 %v846
    %848 = vmatprep.subr.mxu0 0.0
    %v849 = vand.u32 %v729, 4294901760
    %v850 = vsub.f32 %v729, %v849
    %v851 = vand.u32 %v850, 4294901760
    %v852 = vsub.f32 %v850, %v851
    %v853 = vand.u32 %v852, 4294901760
    %854 = vmatpush1.msra.mxu0 %v853
    %855 = vmatprep.subr.mxu0 0.0
    %v856 = vand.u32 %v730, 4294901760
    %v857 = vsub.f32 %v730, %v856
    %v858 = vand.u32 %v857, 4294901760
    %v859 = vsub.f32 %v857, %v858
    %v860 = vand.u32 %v859, 4294901760
    %861 = vmatpush1.msra.mxu0 %v860
    %862 = vmatprep.subr.mxu0 0.0
    %v863 = vand.u32 %v731, 4294901760
    %v864 = vsub.f32 %v731, %v863
    %v865 = vand.u32 %v864, 4294901760
    %v866 = vsub.f32 %v864, %v865
    %v867 = vand.u32 %v866, 4294901760
    %868 = vmatpush1.msra.mxu0 %v867
    %869 = vmatprep.subr.mxu0 0.0
    %v870 = vand.u32 %v732, 4294901760
    %v871 = vsub.f32 %v732, %v870
    %v872 = vand.u32 %v871, 4294901760
    %v873 = vsub.f32 %v871, %v872
    %v874 = vand.u32 %v873, 4294901760
    %875 = vmatpush1.msra.mxu0 %v874
    %876 = vmatprep.subr.mxu0 0.0
    %v877 = vand.u32 %v733, 4294901760
    %v878 = vsub.f32 %v733, %v877
    %v879 = vand.u32 %v878, 4294901760
    %v880 = vsub.f32 %v878, %v879
    %v881 = vand.u32 %v880, 4294901760
    %882 = vmatpush1.msra.mxu0 %v881
    %883 = vmatprep.subr.mxu0 0.0
    %v884 = vand.u32 %v734, 4294901760
    %v885 = vsub.f32 %v734, %v884
    %v886 = vand.u32 %v885, 4294901760
    %v887 = vsub.f32 %v885, %v886
    %v888 = vand.u32 %v887, 4294901760
    %889 = vmatpush1.msra.mxu0 %v888
    %890 = vmatprep.subr.mxu0 0.0
    %v891 = vand.u32 %v735, 4294901760
    %v892 = vsub.f32 %v735, %v891
    %v893 = vand.u32 %v892, 4294901760
    %v894 = vsub.f32 %v892, %v893
    %v895 = vand.u32 %v894, 4294901760
    %896 = vmatpush1.msra.mxu0 %v895
    %897 = vmatprep.subr.mxu0 0.0
    %v898 = vand.u32 %v736, 4294901760
    %v899 = vsub.f32 %v736, %v898
    %v900 = vand.u32 %v899, 4294901760
    %v901 = vsub.f32 %v899, %v900
    %v902 = vand.u32 %v901, 4294901760
    %903 = vmatpush1.msra.mxu0 %v902
    %904 = vmatprep.subr.mxu0 0.0
    %v905 = vand.u32 %v737, 4294901760
    %v906 = vsub.f32 %v737, %v905
    %v907 = vand.u32 %v906, 4294901760
    %v908 = vsub.f32 %v906, %v907
    %v909 = vand.u32 %v908, 4294901760
    %910 = vmatpush1.msra.mxu0 %v909
    %911 = vmatprep.subr.mxu0 0.0
    %v912 = vand.u32 %v738, 4294901760
    %v913 = vsub.f32 %v738, %v912
    %v914 = vand.u32 %v913, 4294901760
    %v915 = vsub.f32 %v913, %v914
    %v916 = vand.u32 %v915, 4294901760
    %917 = vmatpush1.msra.mxu0 %v916
    %918 = vmatprep.subr.mxu0 0.0
    %v919 = vand.u32 %v739, 4294901760
    %v920 = vsub.f32 %v739, %v919
    %v921 = vand.u32 %v920, 4294901760
    %v922 = vsub.f32 %v920, %v921
    %v923 = vand.u32 %v922, 4294901760
    %924 = vmatpush1.msra.mxu0 %v923
    %925 = vmatprep.subr.mxu0 0.0
    %v926 = vand.u32 %v740, 4294901760
    %v927 = vsub.f32 %v740, %v926
    %v928 = vand.u32 %v927, 4294901760
    %v929 = vsub.f32 %v927, %v928
    %v930 = vand.u32 %v929, 4294901760
    %931 = vmatpush1.msra.mxu0 %v930
    %932 = vmatprep.subr.mxu0 0.0
    %v933 = vand.u32 %v741, 4294901760
    %v934 = vsub.f32 %v741, %v933
    %v935 = vand.u32 %v934, 4294901760
    %v936 = vsub.f32 %v934, %v935
    %v937 = vand.u32 %v936, 4294901760
    %938 = vmatpush1.msra.mxu0 %v937
    %939 = vmatprep.subr.mxu0 0.0
    %v940 = vand.u32 %v742, 4294901760
    %v941 = vsub.f32 %v742, %v940
    %v942 = vand.u32 %v941, 4294901760
    %v943 = vsub.f32 %v941, %v942
    %v944 = vand.u32 %v943, 4294901760
    %945 = vmatpush1.msra.mxu0 %v944
    %946 = vmatprep.subr.mxu0 0.0
    %947 = vmatpush1.msra.mxu0 0.0
    %948 = vmatprep.subr.mxu0 0.0
    %949 = vmatpush1.msra.mxu0 0.0
    %950 = vmatprep.subr.mxu0 0.0
    %951 = vmatpush1.msra.mxu0 0.0
    %952 = vmatprep.subr.mxu0 0.0
    %953 = vmatpush1.msra.mxu0 0.0
    %954 = vmatprep.subr.mxu0 0.0
    %955 = vmatpush1.msra.mxu0 0.0
    %956 = vmatprep.subr.mxu0 0.0
    %957 = vmatpush1.msra.mxu0 0.0
    %958 = vmatprep.subr.mxu0 0.0
    %959 = vmatpush1.msra.mxu0 0.0
    %960 = vmatprep.subr.mxu0 0.0
    %961 = vmatpush1.msra.mxu0 0.0
    %962 = vmatprep.subr.mxu0 0.0
    %963 = vmatpush1.msra.mxu0 0.0
    %964 = vmatprep.subr.mxu0 0.0
    %965 = vmatpush1.msra.mxu0 0.0
    %966 = vmatprep.subr.mxu0 0.0
    %967 = vmatpush1.msra.mxu0 0.0
    %968 = vmatprep.subr.mxu0 0.0
    %969 = vmatpush1.msra.mxu0 0.0
    %970 = vmatprep.subr.mxu0 0.0
    %971 = vmatpush1.msra.mxu0 0.0
    %972 = vmatprep.subr.mxu0 0.0
    %973 = vmatpush1.msra.mxu0 0.0
    %974 = vmatprep.subr.mxu0 0.0
    %975 = vmatpush1.msra.mxu0 0.0
    %976 = vmatprep.subr.mxu0 0.0
    %977 = vmatpush1.msra.mxu0 0.0
    %978 = vmatprep.mubr.f32.mxu0 0.0
    %v979 = vand.u32 %v723, 4294901760
    %980 = vmatmul.mubr.f32.gmra.mrb[0].mxu0 %v979
    %v981 = vpop.f32.mrb[0].mxu0
    %v982 = vadd.f32 %v831, %v981
    %v983 = vpop.f32.mrb[0].mxu0
    %984 = vdwg.mxu0
    %985 = vmatprep.subr.mxu0 0.0
    %v986 = vand.u32 %v727, 4294901760
    %v987 = vsub.f32 %v727, %v986
    %988 = vmatpush1.msra.mxu0 %v987
    %989 = vmatprep.subr.mxu0 0.0
    %v990 = vand.u32 %v728, 4294901760
    %v991 = vsub.f32 %v728, %v990
    %992 = vmatpush1.msra.mxu0 %v991
    %993 = vmatprep.subr.mxu0 0.0
    %v994 = vand.u32 %v729, 4294901760
    %v995 = vsub.f32 %v729, %v994
    %996 = vmatpush1.msra.mxu0 %v995
    %997 = vmatprep.subr.mxu0 0.0
    %v998 = vand.u32 %v730, 4294901760
    %v999 = vsub.f32 %v730, %v998
    %1000 = vmatpush1.msra.mxu0 %v999
    %1001 = vmatprep.subr.mxu0 0.0
    %v1002 = vand.u32 %v731, 4294901760
    %v1003 = vsub.f32 %v731, %v1002
    %1004 = vmatpush1.msra.mxu0 %v1003
    %1005 = vmatprep.subr.mxu0 0.0
    %v1006 = vand.u32 %v732, 4294901760
    %v1007 = vsub.f32 %v732, %v1006
    %1008 = vmatpush1.msra.mxu0 %v1007
    %1009 = vmatprep.subr.mxu0 0.0
    %v1010 = vand.u32 %v733, 4294901760
    %v1011 = vsub.f32 %v733, %v1010
    %1012 = vmatpush1.msra.mxu0 %v1011
    %1013 = vmatprep.subr.mxu0 0.0
    %v1014 = vand.u32 %v734, 4294901760
    %v1015 = vsub.f32 %v734, %v1014
    %1016 = vmatpush1.msra.mxu0 %v1015
    %1017 = vmatprep.subr.mxu0 0.0
    %v1018 = vand.u32 %v735, 4294901760
    %v1019 = vsub.f32 %v735, %v1018
    %1020 = vmatpush1.msra.mxu0 %v1019
    %1021 = vmatprep.subr.mxu0 0.0
    %v1022 = vand.u32 %v736, 4294901760
    %v1023 = vsub.f32 %v736, %v1022
    %1024 = vmatpush1.msra.mxu0 %v1023
    %1025 = vmatprep.subr.mxu0 0.0
    %v1026 = vand.u32 %v737, 4294901760
    %v1027 = vsub.f32 %v737, %v1026
    %1028 = vmatpush1.msra.mxu0 %v1027
    %1029 = vmatprep.subr.mxu0 0.0
    %v1030 = vand.u32 %v738, 4294901760
    %v1031 = vsub.f32 %v738, %v1030
    %1032 = vmatpush1.msra.mxu0 %v1031
    %1033 = vmatprep.subr.mxu0 0.0
    %v1034 = vand.u32 %v739, 4294901760
    %v1035 = vsub.f32 %v739, %v1034
    %1036 = vmatpush1.msra.mxu0 %v1035
    %1037 = vmatprep.subr.mxu0 0.0
    %v1038 = vand.u32 %v740, 4294901760
    %v1039 = vsub.f32 %v740, %v1038
    %1040 = vmatpush1.msra.mxu0 %v1039
    %1041 = vmatprep.subr.mxu0 0.0
    %v1042 = vand.u32 %v741, 4294901760
    %v1043 = vsub.f32 %v741, %v1042
    %1044 = vmatpush1.msra.mxu0 %v1043
    %1045 = vmatprep.subr.mxu0 0.0
    %v1046 = vand.u32 %v742, 4294901760
    %v1047 = vsub.f32 %v742, %v1046
    %1048 = vmatpush1.msra.mxu0 %v1047
    %1049 = vmatprep.subr.mxu0 0.0
    %1050 = vmatpush1.msra.mxu0 0.0
    %1051 = vmatprep.subr.mxu0 0.0
    %1052 = vmatpush1.msra.mxu0 0.0
    %1053 = vmatprep.subr.mxu0 0.0
    %1054 = vmatpush1.msra.mxu0 0.0
    %1055 = vmatprep.subr.mxu0 0.0
    %1056 = vmatpush1.msra.mxu0 0.0
    %1057 = vmatprep.subr.mxu0 0.0
    %1058 = vmatpush1.msra.mxu0 0.0
    %1059 = vmatprep.subr.mxu0 0.0
    %1060 = vmatpush1.msra.mxu0 0.0
    %1061 = vmatprep.subr.mxu0 0.0
    %1062 = vmatpush1.msra.mxu0 0.0
    %1063 = vmatprep.subr.mxu0 0.0
    %1064 = vmatpush1.msra.mxu0 0.0
    %1065 = vmatprep.subr.mxu0 0.0
    %1066 = vmatpush1.msra.mxu0 0.0
    %1067 = vmatprep.subr.mxu0 0.0
    %1068 = vmatpush1.msra.mxu0 0.0
    %1069 = vmatprep.subr.mxu0 0.0
    %1070 = vmatpush1.msra.mxu0 0.0
    %1071 = vmatprep.subr.mxu0 0.0
    %1072 = vmatpush1.msra.mxu0 0.0
    %1073 = vmatprep.subr.mxu0 0.0
    %1074 = vmatpush1.msra.mxu0 0.0
    %1075 = vmatprep.subr.mxu0 0.0
    %1076 = vmatpush1.msra.mxu0 0.0
    %1077 = vmatprep.subr.mxu0 0.0
    %1078 = vmatpush1.msra.mxu0 0.0
    %1079 = vmatprep.subr.mxu0 0.0
    %1080 = vmatpush1.msra.mxu0 0.0
    %1081 = vmatprep.mubr.f32.mxu0 0.0
    %v1082 = vand.u32 %v723, 4294901760
    %v1083 = vsub.f32 %v723, %v1082
    %1084 = vmatmul.mubr.f32.gmra.mrb[0].mxu0 %v1083
    %v1085 = vpop.f32.mrb[0].mxu0
    %v1086 = vadd.f32 %v982, %v1085
    %v1087 = vpop.f32.mrb[0].mxu0
    %1088 = vdwg.mxu0
    %1089 = vmatprep.subr.mxu0 0.0
    %v1090 = vand.u32 %v727, 4294901760
    %1091 = vmatpush1.msra.mxu0 %v1090
    %1092 = vmatprep.subr.mxu0 0.0
    %v1093 = vand.u32 %v728, 4294901760
    %1094 = vmatpush1.msra.mxu0 %v1093
    %1095 = vmatprep.subr.mxu0 0.0
    %v1096 = vand.u32 %v729, 4294901760
    %1097 = vmatpush1.msra.mxu0 %v1096
    %1098 = vmatprep.subr.mxu0 0.0
    %v1099 = vand.u32 %v730, 4294901760
    %1100 = vmatpush1.msra.mxu0 %v1099
    %1101 = vmatprep.subr.mxu0 0.0
    %v1102 = vand.u32 %v731, 4294901760
    %1103 = vmatpush1.msra.mxu0 %v1102
    %1104 = vmatprep.subr.mxu0 0.0
    %v1105 = vand.u32 %v732, 4294901760
    %1106 = vmatpush1.msra.mxu0 %v1105
    %1107 = vmatprep.subr.mxu0 0.0
    %v1108 = vand.u32 %v733, 4294901760
    %1109 = vmatpush1.msra.mxu0 %v1108
    %1110 = vmatprep.subr.mxu0 0.0
    %v1111 = vand.u32 %v734, 4294901760
    %1112 = vmatpush1.msra.mxu0 %v1111
    %1113 = vmatprep.subr.mxu0 0.0
    %v1114 = vand.u32 %v735, 4294901760
    %1115 = vmatpush1.msra.mxu0 %v1114
    %1116 = vmatprep.subr.mxu0 0.0
    %v1117 = vand.u32 %v736, 4294901760
    %1118 = vmatpush1.msra.mxu0 %v1117
    %1119 = vmatprep.subr.mxu0 0.0
    %v1120 = vand.u32 %v737, 4294901760
    %1121 = vmatpush1.msra.mxu0 %v1120
    %1122 = vmatprep.subr.mxu0 0.0
    %v1123 = vand.u32 %v738, 4294901760
    %1124 = vmatpush1.msra.mxu0 %v1123
    %1125 = vmatprep.subr.mxu0 0.0
    %v1126 = vand.u32 %v739, 4294901760
    %1127 = vmatpush1.msra.mxu0 %v1126
    %1128 = vmatprep.subr.mxu0 0.0
    %v1129 = vand.u32 %v740, 4294901760
    %1130 = vmatpush1.msra.mxu0 %v1129
    %1131 = vmatprep.subr.mxu0 0.0
    %v1132 = vand.u32 %v741, 4294901760
    %1133 = vmatpush1.msra.mxu0 %v1132
    %1134 = vmatprep.subr.mxu0 0.0
    %v1135 = vand.u32 %v742, 4294901760
    %1136 = vmatpush1.msra.mxu0 %v1135
    %1137 = vmatprep.subr.mxu0 0.0
    %1138 = vmatpush1.msra.mxu0 0.0
    %1139 = vmatprep.subr.mxu0 0.0
    %1140 = vmatpush1.msra.mxu0 0.0
    %1141 = vmatprep.subr.mxu0 0.0
    %1142 = vmatpush1.msra.mxu0 0.0
    %1143 = vmatprep.subr.mxu0 0.0
    %1144 = vmatpush1.msra.mxu0 0.0
    %1145 = vmatprep.subr.mxu0 0.0
    %1146 = vmatpush1.msra.mxu0 0.0
    %1147 = vmatprep.subr.mxu0 0.0
    %1148 = vmatpush1.msra.mxu0 0.0
    %1149 = vmatprep.subr.mxu0 0.0
    %1150 = vmatpush1.msra.mxu0 0.0
    %1151 = vmatprep.subr.mxu0 0.0
    %1152 = vmatpush1.msra.mxu0 0.0
    %1153 = vmatprep.subr.mxu0 0.0
    %1154 = vmatpush1.msra.mxu0 0.0
    %1155 = vmatprep.subr.mxu0 0.0
    %1156 = vmatpush1.msra.mxu0 0.0
    %1157 = vmatprep.subr.mxu0 0.0
    %1158 = vmatpush1.msra.mxu0 0.0
    %1159 = vmatprep.subr.mxu0 0.0
    %1160 = vmatpush1.msra.mxu0 0.0
    %1161 = vmatprep.subr.mxu0 0.0
    %1162 = vmatpush1.msra.mxu0 0.0
    %1163 = vmatprep.subr.mxu0 0.0
    %1164 = vmatpush1.msra.mxu0 0.0
    %1165 = vmatprep.subr.mxu0 0.0
    %1166 = vmatpush1.msra.mxu0 0.0
    %1167 = vmatprep.subr.mxu0 0.0
    %1168 = vmatpush1.msra.mxu0 0.0
    %1169 = vmatprep.mubr.f32.mxu0 0.0
    %v1170 = vand.u32 %v723, 4294901760
    %v1171 = vsub.f32 %v723, %v1170
    %v1172 = vand.u32 %v1171, 4294901760
    %1173 = vmatmul.mubr.f32.gmra.mrb[0].mxu0 %v1172
    %v1174 = vpop.f32.mrb[0].mxu0
    %v1175 = vadd.f32 %v1086, %v1174
    %v1176 = vpop.f32.mrb[0].mxu0
    %1177 = vdwg.mxu0
    %1178 = vmatprep.subr.mxu0 0.0
    %v1179 = vand.u32 %v727, 4294901760
    %v1180 = vsub.f32 %v727, %v1179
    %v1181 = vand.u32 %v1180, 4294901760
    %1182 = vmatpush1.msra.mxu0 %v1181
    %1183 = vmatprep.subr.mxu0 0.0
    %v1184 = vand.u32 %v728, 4294901760
    %v1185 = vsub.f32 %v728, %v1184
    %v1186 = vand.u32 %v1185, 4294901760
    %1187 = vmatpush1.msra.mxu0 %v1186
    %1188 = vmatprep.subr.mxu0 0.0
    %v1189 = vand.u32 %v729, 4294901760
    %v1190 = vsub.f32 %v729, %v1189
    %v1191 = vand.u32 %v1190, 4294901760
    %1192 = vmatpush1.msra.mxu0 %v1191
    %1193 = vmatprep.subr.mxu0 0.0
    %v1194 = vand.u32 %v730, 4294901760
    %v1195 = vsub.f32 %v730, %v1194
    %v1196 = vand.u32 %v1195, 4294901760
    %1197 = vmatpush1.msra.mxu0 %v1196
    %1198 = vmatprep.subr.mxu0 0.0
    %v1199 = vand.u32 %v731, 4294901760
    %v1200 = vsub.f32 %v731, %v1199
    %v1201 = vand.u32 %v1200, 4294901760
    %1202 = vmatpush1.msra.mxu0 %v1201
    %1203 = vmatprep.subr.mxu0 0.0
    %v1204 = vand.u32 %v732, 4294901760
    %v1205 = vsub.f32 %v732, %v1204
    %v1206 = vand.u32 %v1205, 4294901760
    %1207 = vmatpush1.msra.mxu0 %v1206
    %1208 = vmatprep.subr.mxu0 0.0
    %v1209 = vand.u32 %v733, 4294901760
    %v1210 = vsub.f32 %v733, %v1209
    %v1211 = vand.u32 %v1210, 4294901760
    %1212 = vmatpush1.msra.mxu0 %v1211
    %1213 = vmatprep.subr.mxu0 0.0
    %v1214 = vand.u32 %v734, 4294901760
    %v1215 = vsub.f32 %v734, %v1214
    %v1216 = vand.u32 %v1215, 4294901760
    %1217 = vmatpush1.msra.mxu0 %v1216
    %1218 = vmatprep.subr.mxu0 0.0
    %v1219 = vand.u32 %v735, 4294901760
    %v1220 = vsub.f32 %v735, %v1219
    %v1221 = vand.u32 %v1220, 4294901760
    %1222 = vmatpush1.msra.mxu0 %v1221
    %1223 = vmatprep.subr.mxu0 0.0
    %v1224 = vand.u32 %v736, 4294901760
    %v1225 = vsub.f32 %v736, %v1224
    %v1226 = vand.u32 %v1225, 4294901760
    %1227 = vmatpush1.msra.mxu0 %v1226
    %1228 = vmatprep.subr.mxu0 0.0
    %v1229 = vand.u32 %v737, 4294901760
    %v1230 = vsub.f32 %v737, %v1229
    %v1231 = vand.u32 %v1230, 4294901760
    %1232 = vmatpush1.msra.mxu0 %v1231
    %1233 = vmatprep.subr.mxu0 0.0
    %v1234 = vand.u32 %v738, 4294901760
    %v1235 = vsub.f32 %v738, %v1234
    %v1236 = vand.u32 %v1235, 4294901760
    %1237 = vmatpush1.msra.mxu0 %v1236
    %1238 = vmatprep.subr.mxu0 0.0
    %v1239 = vand.u32 %v739, 4294901760
    %v1240 = vsub.f32 %v739, %v1239
    %v1241 = vand.u32 %v1240, 4294901760
    %1242 = vmatpush1.msra.mxu0 %v1241
    %1243 = vmatprep.subr.mxu0 0.0
    %v1244 = vand.u32 %v740, 4294901760
    %v1245 = vsub.f32 %v740, %v1244
    %v1246 = vand.u32 %v1245, 4294901760
    %1247 = vmatpush1.msra.mxu0 %v1246
    %1248 = vmatprep.subr.mxu0 0.0
    %v1249 = vand.u32 %v741, 4294901760
    %v1250 = vsub.f32 %v741, %v1249
    %v1251 = vand.u32 %v1250, 4294901760
    %1252 = vmatpush1.msra.mxu0 %v1251
    %1253 = vmatprep.subr.mxu0 0.0
    %v1254 = vand.u32 %v742, 4294901760
    %v1255 = vsub.f32 %v742, %v1254
    %v1256 = vand.u32 %v1255, 4294901760
    %1257 = vmatpush1.msra.mxu0 %v1256
    %1258 = vmatprep.subr.mxu0 0.0
    %1259 = vmatpush1.msra.mxu0 0.0
    %1260 = vmatprep.subr.mxu0 0.0
    %1261 = vmatpush1.msra.mxu0 0.0
    %1262 = vmatprep.subr.mxu0 0.0
    %1263 = vmatpush1.msra.mxu0 0.0
    %1264 = vmatprep.subr.mxu0 0.0
    %1265 = vmatpush1.msra.mxu0 0.0
    %1266 = vmatprep.subr.mxu0 0.0
    %1267 = vmatpush1.msra.mxu0 0.0
    %1268 = vmatprep.subr.mxu0 0.0
    %1269 = vmatpush1.msra.mxu0 0.0
    %1270 = vmatprep.subr.mxu0 0.0
    %1271 = vmatpush1.msra.mxu0 0.0
    %1272 = vmatprep.subr.mxu0 0.0
    %1273 = vmatpush1.msra.mxu0 0.0
    %1274 = vmatprep.subr.mxu0 0.0
    %1275 = vmatpush1.msra.mxu0 0.0
    %1276 = vmatprep.subr.mxu0 0.0
    %1277 = vmatpush1.msra.mxu0 0.0
    %1278 = vmatprep.subr.mxu0 0.0
    %1279 = vmatpush1.msra.mxu0 0.0
    %1280 = vmatprep.subr.mxu0 0.0
    %1281 = vmatpush1.msra.mxu0 0.0
    %1282 = vmatprep.subr.mxu0 0.0
    %1283 = vmatpush1.msra.mxu0 0.0
    %1284 = vmatprep.subr.mxu0 0.0
    %1285 = vmatpush1.msra.mxu0 0.0
    %1286 = vmatprep.subr.mxu0 0.0
    %1287 = vmatpush1.msra.mxu0 0.0
    %1288 = vmatprep.subr.mxu0 0.0
    %1289 = vmatpush1.msra.mxu0 0.0
    %1290 = vmatprep.mubr.f32.mxu0 0.0
    %v1291 = vand.u32 %v723, 4294901760
    %1292 = vmatmul.mubr.f32.gmra.mrb[0].mxu0 %v1291
    %v1293 = vpop.f32.mrb[0].mxu0
    %v1294 = vadd.f32 %v1175, %v1293
    %v1295 = vpop.f32.mrb[0].mxu0
    %1296 = vdwg.mxu0
    %1297 = vmatprep.subr.mxu0 0.0
    %v1298 = vand.u32 %v727, 4294901760
    %1299 = vmatpush1.msra.mxu0 %v1298
    %1300 = vmatprep.subr.mxu0 0.0
    %v1301 = vand.u32 %v728, 4294901760
    %1302 = vmatpush1.msra.mxu0 %v1301
    %1303 = vmatprep.subr.mxu0 0.0
    %v1304 = vand.u32 %v729, 4294901760
    %1305 = vmatpush1.msra.mxu0 %v1304
    %1306 = vmatprep.subr.mxu0 0.0
    %v1307 = vand.u32 %v730, 4294901760
    %1308 = vmatpush1.msra.mxu0 %v1307
    %1309 = vmatprep.subr.mxu0 0.0
    %v1310 = vand.u32 %v731, 4294901760
    %1311 = vmatpush1.msra.mxu0 %v1310
    %1312 = vmatprep.subr.mxu0 0.0
    %v1313 = vand.u32 %v732, 4294901760
    %1314 = vmatpush1.msra.mxu0 %v1313
    %1315 = vmatprep.subr.mxu0 0.0
    %v1316 = vand.u32 %v733, 4294901760
    %1317 = vmatpush1.msra.mxu0 %v1316
    %1318 = vmatprep.subr.mxu0 0.0
    %v1319 = vand.u32 %v734, 4294901760
    %1320 = vmatpush1.msra.mxu0 %v1319
    %1321 = vmatprep.subr.mxu0 0.0
    %v1322 = vand.u32 %v735, 4294901760
    %1323 = vmatpush1.msra.mxu0 %v1322
    %1324 = vmatprep.subr.mxu0 0.0
    %v1325 = vand.u32 %v736, 4294901760
    %1326 = vmatpush1.msra.mxu0 %v1325
    %1327 = vmatprep.subr.mxu0 0.0
    %v1328 = vand.u32 %v737, 4294901760
    %1329 = vmatpush1.msra.mxu0 %v1328
    %1330 = vmatprep.subr.mxu0 0.0
    %v1331 = vand.u32 %v738, 4294901760
    %1332 = vmatpush1.msra.mxu0 %v1331
    %1333 = vmatprep.subr.mxu0 0.0
    %v1334 = vand.u32 %v739, 4294901760
    %1335 = vmatpush1.msra.mxu0 %v1334
    %1336 = vmatprep.subr.mxu0 0.0
    %v1337 = vand.u32 %v740, 4294901760
    %1338 = vmatpush1.msra.mxu0 %v1337
    %1339 = vmatprep.subr.mxu0 0.0
    %v1340 = vand.u32 %v741, 4294901760
    %1341 = vmatpush1.msra.mxu0 %v1340
    %1342 = vmatprep.subr.mxu0 0.0
    %v1343 = vand.u32 %v742, 4294901760
    %1344 = vmatpush1.msra.mxu0 %v1343
    %1345 = vmatprep.subr.mxu0 0.0
    %1346 = vmatpush1.msra.mxu0 0.0
    %1347 = vmatprep.subr.mxu0 0.0
    %1348 = vmatpush1.msra.mxu0 0.0
    %1349 = vmatprep.subr.mxu0 0.0
    %1350 = vmatpush1.msra.mxu0 0.0
    %1351 = vmatprep.subr.mxu0 0.0
    %1352 = vmatpush1.msra.mxu0 0.0
    %1353 = vmatprep.subr.mxu0 0.0
    %1354 = vmatpush1.msra.mxu0 0.0
    %1355 = vmatprep.subr.mxu0 0.0
    %1356 = vmatpush1.msra.mxu0 0.0
    %1357 = vmatprep.subr.mxu0 0.0
    %1358 = vmatpush1.msra.mxu0 0.0
    %1359 = vmatprep.subr.mxu0 0.0
    %1360 = vmatpush1.msra.mxu0 0.0
    %1361 = vmatprep.subr.mxu0 0.0
    %1362 = vmatpush1.msra.mxu0 0.0
    %1363 = vmatprep.subr.mxu0 0.0
    %1364 = vmatpush1.msra.mxu0 0.0
    %1365 = vmatprep.subr.mxu0 0.0
    %1366 = vmatpush1.msra.mxu0 0.0
    %1367 = vmatprep.subr.mxu0 0.0
    %1368 = vmatpush1.msra.mxu0 0.0
    %1369 = vmatprep.subr.mxu0 0.0
    %1370 = vmatpush1.msra.mxu0 0.0
    %1371 = vmatprep.subr.mxu0 0.0
    %1372 = vmatpush1.msra.mxu0 0.0
    %1373 = vmatprep.subr.mxu0 0.0
    %1374 = vmatpush1.msra.mxu0 0.0
    %1375 = vmatprep.subr.mxu0 0.0
    %1376 = vmatpush1.msra.mxu0 0.0
    %1377 = vmatprep.mubr.f32.mxu0 0.0
    %v1378 = vand.u32 %v723, 4294901760
    %1379 = vmatmul.mubr.f32.gmra.mrb[0].mxu0 %v1378
    %v1380 = vpop.f32.mrb[0].mxu0
    %v1381 = vadd.f32 %v1294, %v1380
    %v1382 = vpop.f32.mrb[0].mxu0
    %1383 = vdwg.mxu0
    %v1384 = vadd.f32 %v726, %v1381
    %v1385 = vtanh.pop %v1384
    %s1386 = scalar_lea.vmem [#allocation8], 8
    %1387 = vst [vmem:[%s1386] sm:$0xff] %v1385
    %1388 = vst [vmem:[#allocation9] sm:$0xff] %v1385
    // Predicated region
    $region30: #{tpu_custom_call.1} parent=1 // pred_check
      _
    $region31: #{tpu_custom_call.1} parent=1 // pred_check_branch
      %1390 = sbr.rel (0) target = $region33
    $region32: #{tpu_custom_call.1} parent=1 // pred_region
      %s1392 = ssub.s32 256, 256
      %1393 = vsyncadd [#allocation4], %s1392
      %s1394 = sshll.u32 [#allocation8], 4
      %s1395 = int_to_ptr.vmem [resolvable:$true] %s1394
      %1400 = dma.vmem_to_hbm [thread:$0]  %s1395, 256, %s3, [#allocation4], 128, 128, 8
    $region33: #{tpu_custom_call.1} parent=1 // pred_fallthru
      _
    // Predicated region
    $region34: #{tpu_custom_call.1} parent=1 // pred_check
      _
    $region35: #{tpu_custom_call.1} parent=1 // pred_check_branch
      %1402 = sbr.rel (0) target = $region37
    $region36: #{tpu_custom_call.1} parent=1 // pred_region
      %s1404 = ssub.s32 128, 128
      %1405 = vsyncadd [#allocation10], %s1404
      %s1407 = sshll.u32 [#allocation9], 4
      %s1408 = int_to_ptr.vmem [resolvable:$true] %s1407
      %1410 = dma.vmem_to_hbm [thread:$0]  %s1408, 128, %s4, [#allocation10]
    $region37: #{tpu_custom_call.1} parent=1 // pred_fallthru
      _
    // Predicated region
    $region38: #{tpu_custom_call.1} parent=1 // pred_check
      _
    $region39: #{tpu_custom_call.1} parent=1 // pred_check_branch
      %1412 = sbr.rel (0) target = $region41
    $region40: #{tpu_custom_call.1} parent=1 // pred_region
      %1413 = dma.done [#allocation4], 256
    $region41: #{tpu_custom_call.1} parent=1 // pred_fallthru
      _
    // Predicated region
    $region42: #{tpu_custom_call.1} parent=1 // pred_check
      _
    $region43: #{tpu_custom_call.1} parent=1 // pred_check_branch
      %1415 = sbr.rel (0) target = $region45
    $region44: #{tpu_custom_call.1} parent=1 // pred_region
      %1416 = dma.done [#allocation10], 128
    $region45: #{tpu_custom_call.1} parent=1 // pred_fallthru
      _
    %1417 = vsyncpa [#allocation3], 1
    %1418 = vsyncpa [#allocation6], 1
    %1419 = vsyncpa [#allocation4], 1
    %1420 = vsyncpa [#allocation10], 1

</llo_original>
